<compile_context>
chip_gen: v7x
topology: tpu7x:2x2x1
jax: 0.10.0
libtpu: 0.0.40
codegen_flags: <defaults>
</compile_context>

<pallas_src>
import functools

import numpy as np
import jax
import jax.numpy as jnp
from jax import lax
from jax.experimental import pallas as pl
from jax.experimental.pallas import tpu as pltpu


def _pair_indices(num_fields):
    row, col = [], []
    for i in range(num_fields - 1):
        for j in range(i + 1, num_fields):
            row.append(i)
            col.append(j)
    return tuple(row), tuple(col)


def _round_up(n, m):
    return -(-n // m) * m


def _afm_kernel(emb_ref, lin_ref, wattn_ref, battn_ref, wproj_ref, wfc_ref,
                out_ref, stack_ref, *, num_fields, embed_dim, tile_b, row, col):
    """Fused AFM forward for one batch tile.

    emb_ref:   (TB, F*D)  f32/bf16  packed per-sample embedding rows
    lin_ref:   (1, TB)    f32       precomputed linear term (incl. lin_b + b_fc)
    wattn_ref: (D, A)     f32       attention weight, pre-transposed
    battn_ref: (1, A)     f32       attention bias
    wproj_ref: (1, A)     f32       projection weight row (b_proj cancels in softmax)
    wfc_ref:   (1, D)     f32       fc weight row (b_fc folded into lin_ref)
    out_ref:   (1, TB)    f32       sigmoid(logits), lane-dense
    stack_ref: (P*TB, D)  f32       VMEM scratch holding all pairwise products
    """
    F, D, TB = num_fields, embed_dim, tile_b
    P = len(row)

    # Upcast once (bf16 input DMA halves HBM bytes; VPU math stays f32 -> v5e-safe).
    emb = emb_ref[...].astype(jnp.float32)                        # (TB, F*D)
    fields = [emb[:, f * D:(f + 1) * D] for f in range(F)]        # F x (TB, D) lane slices

    # Pairwise products written straight into scratch (no concatenate copy).
    # TODO(synk): for large field counts (P >~ 50) switch to a lax.fori_loop over pair
    # chunks with an online softmax instead of this static unroll.
    for k in range(P):
        stack_ref[k * TB:(k + 1) * TB, :] = fields[row[k]] * fields[col[k]]

    # Attention MLP over all pairs of this tile: one stacked MXU matmul.
    hidden = jnp.dot(stack_ref[...], wattn_ref[...],
                     preferred_element_type=jnp.float32) + battn_ref[...]
    hidden = jnp.maximum(hidden, 0.0)                             # (P*TB, A)

    # Projection to one score per (sample, pair): VPU mul + lane reduce (b_proj dropped).
    scores = jnp.sum(hidden * wproj_ref[...], axis=-1, keepdims=True)   # (P*TB, 1)
    s = [scores[k * TB:(k + 1) * TB, :] for k in range(P)]              # P x (TB, 1)

    # Softmax over the pair axis, computed incrementally on (TB, 1) slices.
    m = s[0]
    for k in range(1, P):
        m = jnp.maximum(m, s[k])
    exps = [jnp.exp(sk - m) for sk in s]
    denom = exps[0]
    for k in range(1, P):
        denom = denom + exps[k]
    inv = pl.reciprocal(denom, approx=True)                       # (TB, 1), EUP slot

    # Attention-weighted sum of pair products (dropout == identity in eval mode).
    attn_out = (exps[0] * inv) * stack_ref[0:TB, :]
    for k in range(1, P):
        attn_out = attn_out + (exps[k] * inv) * stack_ref[k * TB:(k + 1) * TB, :]

    # Final fc as (1, D) x (TB, D)^T -> (1, TB): logits land lane-dense, so the
    # output store is a full-lane vst rather than a (TB, 1) masked partial store.
    afm_row = lax.dot_general(wfc_ref[...], attn_out,
                              dimension_numbers=(((1,), (1,)), ((), ())),
                              preferred_element_type=jnp.float32)       # (1, TB)
    logits = afm_row + lin_ref[...]
    out_ref[...] = pl.reciprocal(1.0 + jnp.exp(-logits), approx=True)


def afm_forward(x, params, offsets, *, block_b=1024, emb_dtype=jnp.bfloat16):
    """x: (B, F) int32 ids. Returns (B,) f32 = sigmoid(linear(x) + AFM(embed(x)))."""
    B, F = x.shape
    V, D = params["emb"].shape
    A = params["attn_w"].shape[0]
    row, col = _pair_indices(F)
    P = len(row)

    idx = x.astype(jnp.int32) + offsets[None, :].astype(jnp.int32)              # (B, F)
    # O(B*F) embedding gathers in XLA (no one-hot); pack one lane-dense row per sample.
    emb_rows = jnp.take(params["emb"], idx, axis=0).reshape(B, F * D).astype(emb_dtype)
    # Linear term (lin bias and fc bias folded in) precomputed in the wrapper.
    lin_vals = jnp.take(params["lin_w"][:, 0], idx, axis=0).astype(jnp.float32)  # (B, F)
    lin_sum = (jnp.sum(lin_vals, axis=1)
               + params["lin_b"][0] + params["fc_b"][0]).astype(jnp.float32)     # (B,)

    # Batch tile: large (amortize ~0.35us/step pipeline overhead), multiple of 8.
    # TODO(synk): on v7x (64 MiB VMEM, 2 TCs) prefer block_b <= 1024 and >= 2 grid steps.
    TB = int(min(block_b, _round_up(B, 8)))
    TB = max(8, (TB // 8) * 8)
    B_pad = _round_up(B, TB)
    n_tiles = B_pad // TB
    if B_pad != B:
        emb_rows = jnp.pad(emb_rows, ((0, B_pad - B), (0, 0)))
        lin_sum = jnp.pad(lin_sum, ((0, B_pad - B),))
    lin_rows = lin_sum.reshape(n_tiles, TB)                                      # lane-dense

    w_attn_t = params["attn_w"].T.astype(jnp.float32)                            # (D, A)
    b_attn = params["attn_b"].reshape(1, A).astype(jnp.float32)
    w_proj = params["proj_w"].reshape(1, A).astype(jnp.float32)                  # b_proj dropped
    w_fc = params["fc_w"].reshape(1, D).astype(jnp.float32)                      # b_fc folded

    kernel = functools.partial(_afm_kernel, num_fields=F, embed_dim=D,
                               tile_b=TB, row=row, col=col)

    out2d = pl.pallas_call(
        kernel,
        out_shape=jax.ShapeDtypeStruct((n_tiles, TB), jnp.float32),
        grid=(n_tiles,),
        in_specs=[
            pl.BlockSpec((TB, F * D), lambda i: (i, 0)),   # packed embedding rows
            pl.BlockSpec((1, TB), lambda i: (i, 0)),       # linear-term row
            pl.BlockSpec((D, A), lambda i: (0, 0)),        # attention weight^T
            pl.BlockSpec((1, A), lambda i: (0, 0)),        # attention bias
            pl.BlockSpec((1, A), lambda i: (0, 0)),        # projection weight row
            pl.BlockSpec((1, D), lambda i: (0, 0)),        # fc weight row
        ],
        out_specs=pl.BlockSpec((1, TB), lambda i: (i, 0)),
        scratch_shapes=[pltpu.VMEM((P * TB, D), jnp.float32)],
        compiler_params=pltpu.CompilerParams(
            dimension_semantics=("parallel",),
            vmem_limit_bytes=32 * 1024 * 1024),
    )(emb_rows, lin_rows, w_attn_t, b_attn, w_proj, w_fc)

    return out2d.reshape(B_pad)[:B]


def reference_forward(x, params, offsets):
    """Pure-JAX reference matching the PyTorch module (eval mode)."""
    B, F = x.shape
    row, col = _pair_indices(F)
    hp = lax.Precision.HIGHEST

    idx = x.astype(jnp.int32) + offsets[None, :].astype(jnp.int32)
    e = jnp.take(params["emb"], idx, axis=0)                           # (B, F, D)
    lin_vals = jnp.take(params["lin_w"][:, 0], idx, axis=0)            # (B, F)
    linear_term = jnp.sum(lin_vals, axis=1, keepdims=True) + params["lin_b"][None, :]

    p = e[:, jnp.asarray(row), :]
    q = e[:, jnp.asarray(col), :]
    inner = p * q                                                      # (B, P, D)
    h = jax.nn.relu(jnp.einsum("bpd,ad->bpa", inner, params["attn_w"],
                               precision=hp) + params["attn_b"])
    s = jnp.einsum("bpa,oa->bpo", h, params["proj_w"], precision=hp) + params["proj_b"]
    a = jax.nn.softmax(s, axis=1)                                      # (B, P, 1)
    attn_out = jnp.sum(a * inner, axis=1)                              # (B, D)
    afm = jnp.einsum("bd,od->bo", attn_out, params["fc_w"], precision=hp) + params["fc_b"]
    return jax.nn.sigmoid((linear_term + afm)[:, 0])


if __name__ == "__main__":
    key = jax.random.PRNGKey(0)

    # Small config consistent with the module: field_dims, embed_dim, attn_size.
    field_dims = [3, 4, 5]
    embed_dim = 16
    attn_size = 16
    batch = 8
    num_fields = len(field_dims)
    vocab = int(sum(field_dims))

    offsets = jnp.asarray(np.array((0, *np.cumsum(field_dims)[:-1]), dtype=np.int32))

    ks = jax.random.split(key, 8)
    xav = float(np.sqrt(6.0 / (vocab + embed_dim)))
    params = {
        "emb": jax.random.uniform(ks[0], (vocab, embed_dim), jnp.float32, -xav, xav),
        "lin_w": jax.random.normal(ks[1], (vocab, 1), dtype=jnp.float32) * 0.1,
        "lin_b": jnp.zeros((1,), jnp.float32),
        "attn_w": jax.random.normal(ks[2], (attn_size, embed_dim), dtype=jnp.float32) * 0.2,
        "attn_b": jax.random.normal(ks[3], (attn_size,), dtype=jnp.float32) * 0.1,
        "proj_w": jax.random.normal(ks[4], (1, attn_size), dtype=jnp.float32) * 0.2,
        "proj_b": jax.random.normal(ks[5], (1,), dtype=jnp.float32) * 0.1,
        "fc_w": jax.random.normal(ks[6], (1, embed_dim), dtype=jnp.float32) * 0.2,
        "fc_b": jax.random.normal(ks[7], (1,), dtype=jnp.float32) * 0.1,
    }

    kx = jax.random.split(jax.random.fold_in(key, 123), num_fields)
    cols = [jax.random.randint(kx[f], (batch,), 0, field_dims[f], dtype=jnp.int32)
            for f in range(num_fields)]
    x = jnp.stack(cols, axis=1)                     # (batch, num_fields) int32

    ref = jax.block_until_ready(reference_forward(x, params, offsets))

    # f32 embedding DMA path: only deviation from reference is EUP approx reciprocal
    # (softmax denom + sigmoid) and default (vs HIGHEST) matmul precision at K=16.
    out_f32 = jax.block_until_ready(
        afm_forward(x, params, offsets, emb_dtype=jnp.float32))
    assert out_f32.shape == (batch,), out_f32.shape
    np.testing.assert_allclose(np.asarray(out_f32), np.asarray(ref), rtol=2e-3, atol=2e-3)

    # bf16 embedding DMA path (recommended on v6e/v7x): adds bf16 rounding of the
    # gathered embedding rows, hence the looser tolerance.
    out_bf16 = jax.block_until_ready(
        afm_forward(x, params, offsets, emb_dtype=jnp.bfloat16))
    assert out_bf16.shape == (batch,), out_bf16.shape
    np.testing.assert_allclose(np.asarray(out_bf16), np.asarray(ref), rtol=2e-2, atol=1e-2)

    print("KERNEL_OK")
</pallas_src>

<mosaic_0001>
module attributes {stable_mosaic.version = 11 : i64} {
  func.func @_afm_kernel(%arg0: i32, %arg1: memref<8x48xf32, #tpu.memory_space<vmem>>, %arg2: memref<1x8xf32, #tpu.memory_space<vmem>>, %arg3: memref<16x16xf32, #tpu.memory_space<vmem>>, %arg4: memref<1x16xf32, #tpu.memory_space<vmem>>, %arg5: memref<1x16xf32, #tpu.memory_space<vmem>>, %arg6: memref<1x16xf32, #tpu.memory_space<vmem>>, %arg7: memref<1x8xf32, #tpu.memory_space<vmem>>, %arg8: memref<24x16xf32, #tpu.memory_space<vmem>>) attributes {dimension_semantics = [#tpu.dimension_semantics<parallel>], iteration_bounds = array<i64: 1>, scalar_prefetch = 0 : i64, scratch_operands = 1 : i64, tpu.core_type = #tpu.core_type<tc>, window_params = [{transform_indices = @transform_0, window_bounds = array<i64: 8, 48>}, {transform_indices = @transform_1, window_bounds = array<i64: 1, 8>}, {pipeline_mode = #tpu.pipeline_mode<synchronous>, transform_indices = @transform_2, window_bounds = array<i64: 16, 16>}, {pipeline_mode = #tpu.pipeline_mode<synchronous>, transform_indices = @transform_3, window_bounds = array<i64: 1, 16>}, {pipeline_mode = #tpu.pipeline_mode<synchronous>, transform_indices = @transform_4, window_bounds = array<i64: 1, 16>}, {pipeline_mode = #tpu.pipeline_mode<synchronous>, transform_indices = @transform_5, window_bounds = array<i64: 1, 16>}, {transform_indices = @transform_6, window_bounds = array<i64: 1, 8>}]} {
    %c0 = arith.constant 0 : index
    %c0_0 = arith.constant 0 : index
    %0 = vector.load %arg1[%c0, %c0_0] : memref<8x48xf32, #tpu.memory_space<vmem>>, vector<8x48xf32>
    %1 = vector.extract_strided_slice %0 {offsets = [0, 0], sizes = [8, 16], strides = [1, 1]} : vector<8x48xf32> to vector<8x16xf32>
    %2 = vector.extract_strided_slice %0 {offsets = [0, 16], sizes = [8, 16], strides = [1, 1]} : vector<8x48xf32> to vector<8x16xf32>
    %3 = vector.extract_strided_slice %0 {offsets = [0, 32], sizes = [8, 16], strides = [1, 1]} : vector<8x48xf32> to vector<8x16xf32>
    %4 = arith.mulf %1, %2 : vector<8x16xf32>
    %c0_1 = arith.constant 0 : index
    %c0_2 = arith.constant 0 : index
    %5 = vector.load %arg8[%c0_1, %c0_2] : memref<24x16xf32, #tpu.memory_space<vmem>>, vector<8x16xf32>
    tpu.vector_store %arg8[%c0_1, %c0_2], %4 {strides = array<i32>} : memref<24x16xf32, #tpu.memory_space<vmem>>, vector<8x16xf32>,
    %6 = arith.mulf %1, %3 : vector<8x16xf32>
    %c8 = arith.constant 8 : index
    %c0_3 = arith.constant 0 : index
    %7 = vector.load %arg8[%c8, %c0_3] : memref<24x16xf32, #tpu.memory_space<vmem>>, vector<8x16xf32>
    tpu.vector_store %arg8[%c8, %c0_3], %6 {strides = array<i32>} : memref<24x16xf32, #tpu.memory_space<vmem>>, vector<8x16xf32>,
    %8 = arith.mulf %2, %3 : vector<8x16xf32>
    %c16 = arith.constant 16 : index
    %c0_4 = arith.constant 0 : index
    %9 = vector.load %arg8[%c16, %c0_4] : memref<24x16xf32, #tpu.memory_space<vmem>>, vector<8x16xf32>
    tpu.vector_store %arg8[%c16, %c0_4], %8 {strides = array<i32>} : memref<24x16xf32, #tpu.memory_space<vmem>>, vector<8x16xf32>,
    %c0_5 = arith.constant 0 : index
    %c0_6 = arith.constant 0 : index
    %10 = vector.load %arg8[%c0_5, %c0_6] : memref<24x16xf32, #tpu.memory_space<vmem>>, vector<24x16xf32>
    %c0_7 = arith.constant 0 : index
    %c0_8 = arith.constant 0 : index
    %11 = vector.load %arg3[%c0_7, %c0_8] : memref<16x16xf32, #tpu.memory_space<vmem>>, vector<16x16xf32>
    %cst = arith.constant dense<0.000000e+00> : vector<24x16xf32>
    %12 = tpu.matmul %10, %11, %cst {dimension_numbers = #tpu.dot_dimension_numbers<[1], [0], [0], [1], [0, 0, 1, 1], [], []>} : vector<24x16xf32>, vector<16x16xf32>, vector<24x16xf32> -> vector<24x16xf32>
    %c0_9 = arith.constant 0 : index
    %c0_10 = arith.constant 0 : index
    %13 = vector.load %arg4[%c0_9, %c0_10] : memref<1x16xf32, #tpu.memory_space<vmem>>, vector<1x16xf32>
    %14 = vector.broadcast %13 : vector<1x16xf32> to vector<24x16xf32>
    %15 = arith.addf %12, %14 : vector<24x16xf32>
    %cst_11 = arith.constant 0.000000e+00 : f32
    %16 = vector.broadcast %cst_11 : f32 to vector<24x16xf32>
    %17 = arith.maximumf %15, %16 : vector<24x16xf32>
    %c0_12 = arith.constant 0 : index
    %c0_13 = arith.constant 0 : index
    %18 = vector.load %arg5[%c0_12, %c0_13] : memref<1x16xf32, #tpu.memory_space<vmem>>, vector<1x16xf32>
    %19 = vector.broadcast %18 : vector<1x16xf32> to vector<24x16xf32>
    %20 = arith.mulf %17, %19 : vector<24x16xf32>
    %cst_14 = arith.constant dense<0.000000e+00> : vector<24xf32>
    %21 = vector.multi_reduction <add>, %20, %cst_14 [1] : vector<24x16xf32> to vector<24xf32>
    %22 = vector.shape_cast %21 : vector<24xf32> to vector<24x1xf32>
    %23 = vector.extract_strided_slice %22 {offsets = [0, 0], sizes = [8, 1], strides = [1, 1]} : vector<24x1xf32> to vector<8x1xf32>
    %24 = vector.extract_strided_slice %22 {offsets = [8, 0], sizes = [8, 1], strides = [1, 1]} : vector<24x1xf32> to vector<8x1xf32>
    %25 = vector.extract_strided_slice %22 {offsets = [16, 0], sizes = [8, 1], strides = [1, 1]} : vector<24x1xf32> to vector<8x1xf32>
    %26 = arith.maximumf %23, %24 : vector<8x1xf32>
    %27 = arith.maximumf %26, %25 : vector<8x1xf32>
    %28 = arith.subf %23, %27 : vector<8x1xf32>
    %29 = math.exp %28 : vector<8x1xf32>
    %30 = arith.subf %24, %27 : vector<8x1xf32>
    %31 = math.exp %30 : vector<8x1xf32>
    %32 = arith.subf %25, %27 : vector<8x1xf32>
    %33 = math.exp %32 : vector<8x1xf32>
    %34 = arith.addf %29, %31 : vector<8x1xf32>
    %35 = arith.addf %34, %33 : vector<8x1xf32>
    %36 = tpu.reciprocal %35 {approx = true} : vector<8x1xf32> -> vector<8x1xf32>
    %37 = arith.mulf %29, %36 : vector<8x1xf32>
    %c0_15 = arith.constant 0 : index
    %c0_16 = arith.constant 0 : index
    %38 = vector.load %arg8[%c0_15, %c0_16] : memref<24x16xf32, #tpu.memory_space<vmem>>, vector<8x16xf32>
    %39 = vector.broadcast %37 : vector<8x1xf32> to vector<8x16xf32>
    %40 = arith.mulf %39, %38 : vector<8x16xf32>
    %41 = arith.mulf %31, %36 : vector<8x1xf32>
    %c8_17 = arith.constant 8 : index
    %c0_18 = arith.constant 0 : index
    %42 = vector.load %arg8[%c8_17, %c0_18] : memref<24x16xf32, #tpu.memory_space<vmem>>, vector<8x16xf32>
    %43 = vector.broadcast %41 : vector<8x1xf32> to vector<8x16xf32>
    %44 = arith.mulf %43, %42 : vector<8x16xf32>
    %45 = arith.addf %40, %44 : vector<8x16xf32>
    %46 = arith.mulf %33, %36 : vector<8x1xf32>
    %c16_19 = arith.constant 16 : index
    %c0_20 = arith.constant 0 : index
    %47 = vector.load %arg8[%c16_19, %c0_20] : memref<24x16xf32, #tpu.memory_space<vmem>>, vector<8x16xf32>
    %48 = vector.broadcast %46 : vector<8x1xf32> to vector<8x16xf32>
    %49 = arith.mulf %48, %47 : vector<8x16xf32>
    %50 = arith.addf %45, %49 : vector<8x16xf32>
    %c0_21 = arith.constant 0 : index
    %c0_22 = arith.constant 0 : index
    %51 = vector.load %arg6[%c0_21, %c0_22] : memref<1x16xf32, #tpu.memory_space<vmem>>, vector<1x16xf32>
    %cst_23 = arith.constant dense<0.000000e+00> : vector<1x8xf32>
    %52 = tpu.matmul %51, %50, %cst_23 {dimension_numbers = #tpu.dot_dimension_numbers<[1], [1], [0], [0], [0, 0, 1, 0], [], []>} : vector<1x16xf32>, vector<8x16xf32>, vector<1x8xf32> -> vector<1x8xf32>
    %c0_24 = arith.constant 0 : index
    %c0_25 = arith.constant 0 : index
    %53 = vector.load %arg2[%c0_24, %c0_25] : memref<1x8xf32, #tpu.memory_space<vmem>>, vector<1x8xf32>
    %54 = arith.addf %52, %53 : vector<1x8xf32>
    %cst_26 = arith.constant 0.000000e+00 : f32
    %55 = vector.broadcast %cst_26 : f32 to vector<1x8xf32>
    %56 = arith.subf %55, %54 : vector<1x8xf32>
    %57 = math.exp %56 : vector<1x8xf32>
    %cst_27 = arith.constant 1.000000e+00 : f32
    %58 = vector.broadcast %cst_27 : f32 to vector<1x8xf32>
    %59 = arith.addf %58, %57 : vector<1x8xf32>
    %60 = tpu.reciprocal %59 {approx = true} : vector<1x8xf32> -> vector<1x8xf32>
    %c0_28 = arith.constant 0 : index
    %c0_29 = arith.constant 0 : index
    %61 = vector.load %arg7[%c0_28, %c0_29] : memref<1x8xf32, #tpu.memory_space<vmem>>, vector<1x8xf32>
    tpu.vector_store %arg7[%c0_28, %c0_29], %60 {strides = array<i32>} : memref<1x8xf32, #tpu.memory_space<vmem>>, vector<1x8xf32>,
    return
  }
  func.func @transform_0(%arg0: i32) -> (i32, i32) {
    %c0_i32 = arith.constant 0 : i32
    %c0_i32_0 = arith.constant 0 : i32
    return %arg0, %c0_i32 : i32, i32
  }
  func.func @transform_1(%arg0: i32) -> (i32, i32) {
    %c0_i32 = arith.constant 0 : i32
    %c0_i32_0 = arith.constant 0 : i32
    return %arg0, %c0_i32 : i32, i32
  }
  func.func @transform_2(%arg0: i32) -> (i32, i32) {
    %c0_i32 = arith.constant 0 : i32
    %c0_i32_0 = arith.constant 0 : i32
    %c0_i32_1 = arith.constant 0 : i32
    return %c0_i32, %c0_i32_0 : i32, i32
  }
  func.func @transform_3(%arg0: i32) -> (i32, i32) {
    %c0_i32 = arith.constant 0 : i32
    %c0_i32_0 = arith.constant 0 : i32
    %c0_i32_1 = arith.constant 0 : i32
    return %c0_i32, %c0_i32_0 : i32, i32
  }
  func.func @transform_4(%arg0: i32) -> (i32, i32) {
    %c0_i32 = arith.constant 0 : i32
    %c0_i32_0 = arith.constant 0 : i32
    %c0_i32_1 = arith.constant 0 : i32
    return %c0_i32, %c0_i32_0 : i32, i32
  }
  func.func @transform_5(%arg0: i32) -> (i32, i32) {
    %c0_i32 = arith.constant 0 : i32
    %c0_i32_0 = arith.constant 0 : i32
    %c0_i32_1 = arith.constant 0 : i32
    return %c0_i32, %c0_i32_0 : i32, i32
  }
  func.func @transform_6(%arg0: i32) -> (i32, i32) {
    %c0_i32 = arith.constant 0 : i32
    %c0_i32_0 = arith.constant 0 : i32
    return %arg0, %c0_i32 : i32, i32
  }
}

</mosaic_0001>

<llo_original>
// kernel: tpu_custom_call.1
$region0: #{tpu_custom_call.1}
  #allocation0 [shape = 'u32[]', space=smem, size = 0x4, offset = 0x4, fixed_abs, tag = 'smem constant byte address 0x4 - core index']
  #allocation1 [shape = 'u32[144,128]{1,0:T(1,128)}', space=vmem, size = 0x12000, scoped, tag = 'internal scratch']
  #allocation2 [shape = 'f32[24,16]{1,0:T(8,128)}', space=vmem, size = 0x3000, scoped, tag = 'scratch operand']
  %s0 = inlined_call_operand.hbm [shape: f32[8,48], index: 0, kind: input, shape index: {}]
  %s1 = inlined_call_operand.vmem [shape: f32[1,8], index: 1, kind: input, shape index: {}]
  %s2 = inlined_call_operand.hbm [shape: f32[16,16], index: 2, kind: input, shape index: {}]
  %s3 = inlined_call_operand.vmem [shape: f32[1,16], index: 3, kind: input, shape index: {}]
  %s4 = inlined_call_operand.vmem [shape: f32[1,16], index: 4, kind: input, shape index: {}]
  %s5 = inlined_call_operand.vmem [shape: f32[1,16], index: 5, kind: input, shape index: {}]
  %s6 = inlined_call_operand.hbm [shape: f32[1,8], index: 6, kind: output, shape index: {}]
  %s7 = sld [smem:[#allocation0]]
  $region42: #{tpu_custom_call.1} parent=0
    _
  %s9 = ssub.s32 1, %s7
  %s10 = scalar_select 0, %s9, %s7
  $region1: #{tpu_custom_call.1} parent=0
    #allocation3 [shape = 'u8[4096]{0}', space=vmem, size = 0x1000, scoped, tag = 'input window, operand 0, single buffered']
    #allocation4 [shape = 's32[1]{0}', space=sflag, size = 0x4, scoped, tag = 'scoped memory for tpu_custom_call.1']
    #allocation5 [shape = 's32[1]{0}', space=sflag, size = 0x4, scoped, tag = 'scoped memory for tpu_custom_call.1']
    #allocation6 [shape = 'u8[8192]{0}', space=vmem, size = 0x2000, scoped, tag = 'input window, operand 2, single buffered']
    #allocation7 [shape = 's32[1]{0}', space=sflag, size = 0x4, scoped, tag = 'scoped memory for tpu_custom_call.1']
    #allocation8 [shape = 'u8[512]{0}', space=vmem, size = 0x400, scoped, tag = 'output window, operand 0, single buffered']
    %11 = vsyncpa [#allocation4], 0
    %12 = vsyncpa [#allocation7], 0
    %13 = vsyncpa [#allocation5], 0
    // Predicated region
    $region2: #{tpu_custom_call.1} parent=1 // pred_check
      _
    $region3: #{tpu_custom_call.1} parent=1 // pred_check_branch
      %15 = sbr.rel (0) target = $region5
    $region4: #{tpu_custom_call.1} parent=1 // pred_region
      %s17 = ssub.s32 128, 128
      %18 = vsyncadd [#allocation4], %s17
      %s20 = sshll.u32 [#allocation3], 4
      %s21 = int_to_ptr.vmem [resolvable:$true] %s20
      %23 = dma.hbm_to_vmem [thread:$0]  %s0, 128, %s21, [#allocation4]
    $region5: #{tpu_custom_call.1} parent=1 // pred_fallthru
      _
    // Predicated region
    $region6: #{tpu_custom_call.1} parent=1 // pred_check
      _
    $region7: #{tpu_custom_call.1} parent=1 // pred_check_branch
      %25 = sbr.rel (0) target = $region9
    $region8: #{tpu_custom_call.1} parent=1 // pred_region
      _
    $region9: #{tpu_custom_call.1} parent=1 // pred_fallthru
      _
    // Predicated region
    $region10: #{tpu_custom_call.1} parent=1 // pred_check
      _
    $region11: #{tpu_custom_call.1} parent=1 // pred_check_branch
      %27 = sbr.rel (0) target = $region13
    $region12: #{tpu_custom_call.1} parent=1 // pred_region
      %s29 = ssub.s32 256, 256
      %30 = vsyncadd [#allocation7], %s29
      %s31 = sshll.u32 [#allocation6], 4
      %s32 = int_to_ptr.vmem [resolvable:$true] %s31
      %37 = dma.hbm_to_vmem [thread:$0]  %s2, 256, %s32, [#allocation7], 128, 128, 8
    $region13: #{tpu_custom_call.1} parent=1 // pred_fallthru
      _
    // Predicated region
    $region14: #{tpu_custom_call.1} parent=1 // pred_check
      _
    $region15: #{tpu_custom_call.1} parent=1 // pred_check_branch
      %39 = sbr.rel (0) target = $region17
    $region16: #{tpu_custom_call.1} parent=1 // pred_region
      _
    $region17: #{tpu_custom_call.1} parent=1 // pred_fallthru
      _
    // Predicated region
    $region18: #{tpu_custom_call.1} parent=1 // pred_check
      _
    $region19: #{tpu_custom_call.1} parent=1 // pred_check_branch
      %41 = sbr.rel (0) target = $region21
    $region20: #{tpu_custom_call.1} parent=1 // pred_region
      _
    $region21: #{tpu_custom_call.1} parent=1 // pred_fallthru
      _
    // Predicated region
    $region22: #{tpu_custom_call.1} parent=1 // pred_check
      _
    $region23: #{tpu_custom_call.1} parent=1 // pred_check_branch
      %43 = sbr.rel (0) target = $region25
    $region24: #{tpu_custom_call.1} parent=1 // pred_region
      _
    $region25: #{tpu_custom_call.1} parent=1 // pred_fallthru
      _
    // Predicated region
    $region26: #{tpu_custom_call.1} parent=1 // pred_check
      _
    $region27: #{tpu_custom_call.1} parent=1 // pred_check_branch
      %45 = sbr.rel (0) target = $region29
    $region28: #{tpu_custom_call.1} parent=1 // pred_region
      %46 = dma.done [#allocation4], 128
    $region29: #{tpu_custom_call.1} parent=1 // pred_fallthru
      _
    // Predicated region
    $region30: #{tpu_custom_call.1} parent=1 // pred_check
      _
    $region31: #{tpu_custom_call.1} parent=1 // pred_check_branch
      %48 = sbr.rel (0) target = $region33
    $region32: #{tpu_custom_call.1} parent=1 // pred_region
      %49 = dma.done [#allocation7], 256
    $region33: #{tpu_custom_call.1} parent=1 // pred_fallthru
      _
    %v50 = vld [vmem:[#allocation3] sm:$0xff]
    %52 = vrot.lane.b32.xlu0 %v50, 112
    %v53 = vpop.permute.xlu0 %52
    %v55 = vmul.f32 %v50, %v53
    %vm56 = vcmask 130048
    %57 = vst.msk [vmem:[#allocation2] sm:$0xff] %vm56, %v55
    %58 = vrot.lane.b32.xlu0 %v50, 96
    %v59 = vpop.permute.xlu0 %58
    %v61 = vmul.f32 %v50, %v59
    %62 = vst.msk [vmem:[#allocation2 + $0x8] sm:$0xff] %vm56, %v61
    %64 = vrot.lane.b32.xlu0 %v55, 112
    %v65 = vpop.permute.xlu0 %64
    %67 = vst.msk [vmem:[#allocation2 + $0x10] sm:$0xff] %vm56, %v65
    %v68 = vld [vmem:[#allocation2] sm:$0xff]
    %v69 = vld [vmem:[#allocation2 + $0x8] sm:$0xff]
    %v70 = vld [vmem:[#allocation2 + $0x10] sm:$0xff]
    %v71 = vld [vmem:[#allocation6] sm:$0xff]
    %v72 = vld [vmem:[#allocation6 + $0x8] sm:$0xff]
    %v73 = vld [vmem:[%s3] sm:$0x1]
    %v75 = vlaneseq
    %v76 = vshrl.u32 %v75, 7
    %v77 = vsub.s32 0, %v76
    %v78 = vrot.slane %v73, %v77
    %v81 = vsel %vm56, %v68, 0
    %v84 = vsel %vm56, %v69, 0
    %v87 = vsel %vm56, %v70, 0
    %89 = vmatprep.subr.mxu0 0.0
    %90 = vmatpush1.msra.mxu0 %v71
    %91 = vmatprep.subr.mxu0 0.0
    %92 = vmatpush1.msra.mxu0 %v72
    %93 = vmatprep.subr.mxu0 0.0
    %94 = vmatpush1.msra.mxu0 0.0
    %95 = vmatprep.subr.mxu0 0.0
    %96 = vmatpush1.msra.mxu0 0.0
    %97 = vmatprep.subr.mxu0 0.0
    %98 = vmatpush1.msra.mxu0 0.0
    %99 = vmatprep.subr.mxu0 0.0
    %100 = vmatpush1.msra.mxu0 0.0
    %101 = vmatprep.subr.mxu0 0.0
    %102 = vmatpush1.msra.mxu0 0.0
    %103 = vmatprep.subr.mxu0 0.0
    %104 = vmatpush1.msra.mxu0 0.0
    %105 = vmatprep.subr.mxu0 0.0
    %106 = vmatpush1.msra.mxu0 0.0
    %107 = vmatprep.subr.mxu0 0.0
    %108 = vmatpush1.msra.mxu0 0.0
    %109 = vmatprep.subr.mxu0 0.0
    %110 = vmatpush1.msra.mxu0 0.0
    %111 = vmatprep.subr.mxu0 0.0
    %112 = vmatpush1.msra.mxu0 0.0
    %113 = vmatprep.subr.mxu0 0.0
    %114 = vmatpush1.msra.mxu0 0.0
    %115 = vmatprep.subr.mxu0 0.0
    %116 = vmatpush1.msra.mxu0 0.0
    %117 = vmatprep.subr.mxu0 0.0
    %118 = vmatpush1.msra.mxu0 0.0
    %119 = vmatprep.subr.mxu0 0.0
    %120 = vmatpush1.msra.mxu0 0.0
    %121 = vmatprep.subr.mxu0 0.0
    %122 = vmatpush1.msra.mxu0 0.0
    %123 = vmatprep.subr.mxu0 0.0
    %124 = vmatpush1.msra.mxu0 0.0
    %125 = vmatprep.subr.mxu0 0.0
    %126 = vmatpush1.msra.mxu0 0.0
    %127 = vmatprep.subr.mxu0 0.0
    %128 = vmatpush1.msra.mxu0 0.0
    %129 = vmatprep.subr.mxu0 0.0
    %130 = vmatpush1.msra.mxu0 0.0
    %131 = vmatprep.subr.mxu0 0.0
    %132 = vmatpush1.msra.mxu0 0.0
    %133 = vmatprep.subr.mxu0 0.0
    %134 = vmatpush1.msra.mxu0 0.0
    %135 = vmatprep.subr.mxu0 0.0
    %136 = vmatpush1.msra.mxu0 0.0
    %137 = vmatprep.subr.mxu0 0.0
    %138 = vmatpush1.msra.mxu0 0.0
    %139 = vmatprep.subr.mxu0 0.0
    %140 = vmatpush1.msra.mxu0 0.0
    %141 = vmatprep.subr.mxu0 0.0
    %142 = vmatpush1.msra.mxu0 0.0
    %143 = vmatprep.subr.mxu0 0.0
    %144 = vmatpush1.msra.mxu0 0.0
    %145 = vmatprep.subr.mxu0 0.0
    %146 = vmatpush1.msra.mxu0 0.0
    %147 = vmatprep.subr.mxu0 0.0
    %148 = vmatpush1.msra.mxu0 0.0
    %149 = vmatprep.subr.mxu0 0.0
    %150 = vmatpush1.msra.mxu0 0.0
    %151 = vmatprep.subr.mxu0 0.0
    %152 = vmatpush1.msra.mxu0 0.0
    %153 = vmatprep.mubr.f32.mxu0 0.0
    %154 = vmatmul.mubr.f32.gmra.mrb[0].mxu0 %v81
    %v155 = vpop.f32.mrb[0].mxu0
    %v156 = vadd.f32 %v78, %v155
    %v157 = vpop.f32.mrb[0].mxu0
    %158 = vmatprep.mubr.f32.mxu0 0.0
    %159 = vmatmul.mubr.f32.gmra.mrb[0].mxu0 %v84
    %v160 = vpop.f32.mrb[0].mxu0
    %v161 = vadd.f32 %v78, %v160
    %v162 = vpop.f32.mrb[0].mxu0
    %163 = vmatprep.mubr.f32.mxu0 0.0
    %164 = vmatmul.mubr.f32.gmra.mrb[0].mxu0 %v87
    %v165 = vpop.f32.mrb[0].mxu0
    %v166 = vadd.f32 %v78, %v165
    %v167 = vpop.f32.mrb[0].mxu0
    %168 = vdwg.mxu0
    %v169 = vmax.f32 %v156, 0.0
    %v170 = vmax.f32 %v161, 0.0
    %v171 = vmax.f32 %v166, 0.0
    %v172 = vld [vmem:[%s4] sm:$0x1]
    %v174 = vlaneseq
    %v175 = vshrl.u32 %v174, 7
    %v176 = vsub.s32 0, %v175
    %v177 = vrot.slane %v172, %v176
    %v179 = vmul.f32 %v169, %v177
    %v180 = vmul.f32 %v170, %v177
    %v181 = vmul.f32 %v171, %v177
    %v182 = vsel %vm56, %v179, 0.0
    %183 = vadd.xlane.f32.xlu0 %v182
    %v184 = vpop.xlane.xlu0 %183
    %v185 = vsel %vm56, %v180, 0.0
    %186 = vadd.xlane.f32.xlu0 %v185
    %v187 = vpop.xlane.xlu0 %186
    %v188 = vsel %vm56, %v181, 0.0
    %189 = vadd.xlane.f32.xlu0 %v188
    %v190 = vpop.xlane.xlu0 %189
    %v191 = vmax.f32 %v184, %v187
    %v192 = vmax.f32 %v191, %v190
    %v193 = vsub.f32 %v184, %v192
    %v194 = vmul.f32 %v193, 1.442695
    %v195 = vpow.pop %v194
    %v196 = vsub.f32 %v187, %v192
    %v197 = vmul.f32 %v196, 1.442695
    %v198 = vpow.pop %v197
    %v199 = vsub.f32 %v190, %v192
    %v200 = vmul.f32 %v199, 1.442695
    %v201 = vpow.pop %v200
    %v202 = vadd.f32 %v195, %v198
    %v203 = vadd.f32 %v202, %v201
    %v204 = vrcp.pop %v203
    %v205 = vmul.f32 %v195, %v204
    %v206 = vld [vmem:[#allocation2] sm:$0xff]
    %v207 = vmul.f32 %v205, %v206
    %v208 = vmul.f32 %v198, %v204
    %v209 = vld [vmem:[#allocation2 + $0x8] sm:$0xff]
    %v210 = vmul.f32 %v208, %v209
    %v211 = vadd.f32 %v207, %v210
    %v212 = vmul.f32 %v201, %v204
    %v213 = vmul.f32 %v212, %v70
    %v214 = vadd.f32 %v211, %v213
    %v215 = vld [vmem:[%s5] sm:$0x1]
    %v216 = vld [vmem:[%s1] sm:$0x1]
    %v218 = vsel %vm56, %v215, 0
    %v221 = vsel %vm56, %v214, 0
    %223 = vmatprep.subr.mxu0 0.0
    %224 = vmatpush1.xpose.msra.mxu0 %v221
    %225 = vmatprep.subr.mxu0 0.0
    %226 = vmatpush1.xpose.msra.mxu0 0.0
    %227 = vmatprep.subr.mxu0 0.0
    %228 = vmatpush1.xpose.msra.mxu0 0.0
    %229 = vmatprep.subr.mxu0 0.0
    %230 = vmatpush1.xpose.msra.mxu0 0.0
    %231 = vmatprep.subr.mxu0 0.0
    %232 = vmatpush1.xpose.msra.mxu0 0.0
    %233 = vmatprep.subr.mxu0 0.0
    %234 = vmatpush1.xpose.msra.mxu0 0.0
    %235 = vmatprep.subr.mxu0 0.0
    %236 = vmatpush1.xpose.msra.mxu0 0.0
    %237 = vmatprep.subr.mxu0 0.0
    %238 = vmatpush1.xpose.msra.mxu0 0.0
    %239 = vmatprep.subr.mxu0 0.0
    %240 = vmatpush1.xpose.msra.mxu0 0.0
    %241 = vmatprep.subr.mxu0 0.0
    %242 = vmatpush1.xpose.msra.mxu0 0.0
    %243 = vmatprep.subr.mxu0 0.0
    %244 = vmatpush1.xpose.msra.mxu0 0.0
    %245 = vmatprep.subr.mxu0 0.0
    %246 = vmatpush1.xpose.msra.mxu0 0.0
    %247 = vmatprep.subr.mxu0 0.0
    %248 = vmatpush1.xpose.msra.mxu0 0.0
    %249 = vmatprep.subr.mxu0 0.0
    %250 = vmatpush1.xpose.msra.mxu0 0.0
    %251 = vmatprep.subr.mxu0 0.0
    %252 = vmatpush1.xpose.msra.mxu0 0.0
    %253 = vmatprep.subr.mxu0 0.0
    %254 = vmatpush1.xpose.msra.mxu0 0.0
    %255 = vmatprep.subr.mxu0 0.0
    %256 = vmatpush1.xpose.msra.mxu0 0.0
    %257 = vmatprep.subr.mxu0 0.0
    %258 = vmatpush1.xpose.msra.mxu0 0.0
    %259 = vmatprep.subr.mxu0 0.0
    %260 = vmatpush1.xpose.msra.mxu0 0.0
    %261 = vmatprep.subr.mxu0 0.0
    %262 = vmatpush1.xpose.msra.mxu0 0.0
    %263 = vmatprep.subr.mxu0 0.0
    %264 = vmatpush1.xpose.msra.mxu0 0.0
    %265 = vmatprep.subr.mxu0 0.0
    %266 = vmatpush1.xpose.msra.mxu0 0.0
    %267 = vmatprep.subr.mxu0 0.0
    %268 = vmatpush1.xpose.msra.mxu0 0.0
    %269 = vmatprep.subr.mxu0 0.0
    %270 = vmatpush1.xpose.msra.mxu0 0.0
    %271 = vmatprep.subr.mxu0 0.0
    %272 = vmatpush1.xpose.msra.mxu0 0.0
    %273 = vmatprep.subr.mxu0 0.0
    %274 = vmatpush1.xpose.msra.mxu0 0.0
    %275 = vmatprep.subr.mxu0 0.0
    %276 = vmatpush1.xpose.msra.mxu0 0.0
    %277 = vmatprep.subr.mxu0 0.0
    %278 = vmatpush1.xpose.msra.mxu0 0.0
    %279 = vmatprep.subr.mxu0 0.0
    %280 = vmatpush1.xpose.msra.mxu0 0.0
    %281 = vmatprep.subr.mxu0 0.0
    %282 = vmatpush1.xpose.msra.mxu0 0.0
    %283 = vmatprep.subr.mxu0 0.0
    %284 = vmatpush1.xpose.msra.mxu0 0.0
    %285 = vmatprep.subr.mxu0 0.0
    %286 = vmatpush1.xpose.msra.mxu0 0.0
    %287 = vmatprep.mubr.f32.mxu0 0.0
    %288 = vmatmul.mubr.f32.gmra.mrb[0].mxu0 %v218
    %v289 = vpop.f32.mrb[0].mxu0
    %v290 = vadd.f32 %v216, %v289
    %v291 = vpop.f32.mrb[0].mxu0
    %292 = vdwg.mxu0
    %v293 = vsub.f32 0.0, %v290
    %v294 = vmul.f32 %v293, 1.442695
    %v295 = vpow.pop %v294
    %v296 = vadd.f32 %v295, 1.0
    %v297 = vrcp.pop %v296
    %vm298 = vcmask 57344
    %299 = vst.msk [vmem:[#allocation8] sm:$0x1] %vm298, %v297
    // Predicated region
    $region34: #{tpu_custom_call.1} parent=1 // pred_check
      _
    $region35: #{tpu_custom_call.1} parent=1 // pred_check_branch
      %301 = sbr.rel (0) target = $region37
    $region36: #{tpu_custom_call.1} parent=1 // pred_region
      %s303 = ssub.s32 16, 16
      %304 = vsyncadd [#allocation5], %s303
      %s306 = sshll.u32 [#allocation8], 4
      %s307 = int_to_ptr.vmem [resolvable:$true] %s306
      %309 = dma.vmem_to_hbm [thread:$0]  %s307, 16, %s6, [#allocation5]
    $region37: #{tpu_custom_call.1} parent=1 // pred_fallthru
      _
    // Predicated region
    $region38: #{tpu_custom_call.1} parent=1 // pred_check
      _
    $region39: #{tpu_custom_call.1} parent=1 // pred_check_branch
      %311 = sbr.rel (0) target = $region41
    $region40: #{tpu_custom_call.1} parent=1 // pred_region
      %312 = dma.done [#allocation5], 16
    $region41: #{tpu_custom_call.1} parent=1 // pred_fallthru
      _
    %313 = vsyncpa [#allocation4], 1
    %314 = vsyncpa [#allocation7], 1
    %315 = vsyncpa [#allocation5], 1

</llo_original>
